<compile_context>
chip_gen: v5e
topology: v5e:2x2
jax: 0.10.0
libtpu: 0.0.40
codegen_flags: <defaults>
</compile_context>

<pallas_src>
import functools
import numpy as np

import jax
import jax.numpy as jnp
from jax.experimental import pallas as pl
from jax.experimental.pallas import tpu as pltpu


# ----------------------------------------------------------------------------
# Pallas kernel 1: patch embedding (= stride-p conv as a tiled matmul)
# ----------------------------------------------------------------------------
def _patch_embed_kernel(x_ref, w_ref, b_ref, o_ref):
    # x: (tm, K) flattened patches (bf16), w: (K, E) bf16, b: (1, E) f32
    o_ref[...] = (
        jnp.dot(x_ref[...], w_ref[...], preferred_element_type=jnp.float32)
        + b_ref[...]
    )


def patch_embed_matmul(patches_bf16, w, b):
    M, K = patches_bf16.shape
    E = w.shape[1]
    tm = M
    for cand in (512, 256, 128, 64, 32, 16, 8):
        if M % cand == 0:
            tm = cand
            break
    return pl.pallas_call(
        _patch_embed_kernel,
        out_shape=jax.ShapeDtypeStruct((M, E), jnp.float32),
        grid=(M // tm,),
        in_specs=[
            pl.BlockSpec((tm, K), lambda i: (i, 0)),
            pl.BlockSpec((K, E), lambda i: (0, 0)),
            pl.BlockSpec((1, E), lambda i: (0, 0)),
        ],
        out_specs=pl.BlockSpec((tm, E), lambda i: (i, 0)),
        compiler_params=pltpu.CompilerParams(
            dimension_semantics=("parallel",)),
    )(patches_bf16, w, b)


# ----------------------------------------------------------------------------
# Pallas kernel 2: one BEiT transformer encoder layer, tiled over query rows
# ----------------------------------------------------------------------------
def _gelu(x):
    # tanh-approximate GELU: the transcendental lowers onto the EUP slot
    # instead of a long VALU polynomial.
    # TODO(synk): torch nn.GELU() default is the exact erf form; the tanh
    #   approximation deviates by ~1e-3 max abs.
    c = 0.7978845608028654  # sqrt(2/pi)
    return 0.5 * x * (1.0 + jnp.tanh(c * (x + 0.044715 * (x * x * x))))


def _layer_norm(z, w, b, eps):
    # two-pass (centered) variance for numerical safety
    mu = jnp.mean(z, axis=-1, keepdims=True)
    d = z - mu
    var = jnp.mean(d * d, axis=-1, keepdims=True)
    return d * jax.lax.rsqrt(var + eps) * w + b


def _split_heads(x2d, num_heads):
    # (n, C) -> (H, n, D) using only a 2-D transpose, a sublane-aligned
    # reshape and a batched last-two-dims transpose (all Mosaic-supported).
    n, c = x2d.shape
    d = c // num_heads
    xt = x2d.T.reshape(num_heads, d, n)          # (H, D, n)
    return jnp.transpose(xt, (0, 2, 1))          # (H, n, D)


def _merge_heads(x3d):
    # (H, n, D) -> (n, H*D), head-major along the channel dim
    h, n, d = x3d.shape
    return jnp.transpose(x3d, (0, 2, 1)).reshape(h * d, n).T


def _beit_layer_kernel(
    xq_ref, xf_ref, ln1w_ref, ln1b_ref, wq_ref, bq_ref, wkv_ref, bkv_ref,
    relb_ref, wproj_ref, bproj_ref, g1_ref, ln2w_ref, ln2b_ref,
    w1_ref, b1_ref, w2_ref, b2_ref, g2_ref, o_ref, *, num_heads, eps,
):
    f32, bf16 = jnp.float32, jnp.bfloat16
    H = num_heads

    x_q = xq_ref[0]                      # (tq, C)  query-row tile of residual
    x_f = xf_ref[0]                      # (Np, C)  full (padded) token block
    tq, C = x_q.shape
    D = C // H
    scale = float(D) ** -0.5

    # ---- attention branch: x + gamma_1 * proj(softmax(qk^T + rel_bias) v) ----
    xn_q = _layer_norm(x_q, ln1w_ref[...], ln1b_ref[...], eps)
    xn_f = _layer_norm(x_f, ln1w_ref[...], ln1b_ref[...], eps)

    # fused lane-dense projections (f32 accumulation on the MXU)
    q = jnp.dot(xn_q.astype(bf16), wq_ref[...],
                preferred_element_type=f32) + bq_ref[...]          # (tq, C)
    q = q * scale
    kv = jnp.dot(xn_f.astype(bf16), wkv_ref[...],
                 preferred_element_type=f32) + bkv_ref[...]        # (Np, 2C)
    k = kv[:, :C]
    v = kv[:, C:]

    # head split only for the score / AV contractions
    qh = _split_heads(q, H).astype(bf16)                           # (H, tq, D)
    kh = _split_heads(k, H).astype(bf16)                           # (H, Np, D)
    vh = _split_heads(v, H).astype(bf16)                           # (H, Np, D)

    s = jnp.einsum('hqd,hkd->hqk', qh, kh,
                   preferred_element_type=f32)                     # (H, tq, Np)
    s = s + relb_ref[...].astype(f32)        # rel-pos bias (+ key-padding mask)
    s = s - jnp.max(s, axis=-1, keepdims=True)
    p = jnp.exp(s)
    p = p * pl.reciprocal(jnp.sum(p, axis=-1, keepdims=True), approx=True)

    o = jnp.einsum('hqk,hkd->hqd', p.astype(bf16), vh,
                   preferred_element_type=f32)                     # (H, tq, D)
    o = _merge_heads(o)                                            # (tq, C)
    a = jnp.dot(o.astype(bf16), wproj_ref[...],
                preferred_element_type=f32) + bproj_ref[...]
    x = x_q + g1_ref[...] * a

    # ---- FFN branch: x + gamma_2 * fc2(gelu(fc1(LN2(x)))) ----
    xn2 = _layer_norm(x, ln2w_ref[...], ln2b_ref[...], eps)
    h1 = jnp.dot(xn2.astype(bf16), w1_ref[...],
                 preferred_element_type=f32) + b1_ref[...]
    h1 = _gelu(h1)
    h2 = jnp.dot(h1.astype(bf16), w2_ref[...],
                 preferred_element_type=f32) + b2_ref[...]
    o_ref[0] = x + g2_ref[...] * h2


def _weight_spec(shape, single_buffer):
    nd = len(shape)
    index_map = lambda b, t, _n=nd: (0,) * _n          # constant across grid
    if single_buffer:
        # resident weights: no need for double-buffering -> halves weight VMEM
        return pl.BlockSpec(shape, index_map, pipeline_mode=pl.Buffered(1))
    return pl.BlockSpec(shape, index_map)


def _beit_layer_call(x, lp, num_heads, tq, eps, single_buffer_weights):
    B, n_pad, C = x.shape
    T = n_pad // tq
    H = num_heads
    kernel = functools.partial(_beit_layer_kernel, num_heads=num_heads, eps=eps)

    pre = [lp["ln1_w"], lp["ln1_b"], lp["wq"], lp["bq"], lp["wkv"], lp["bkv"]]
    post = [lp["proj_w"], lp["proj_b"], lp["gamma_1"], lp["ln2_w"], lp["ln2_b"],
            lp["fc1_w"], lp["fc1_b"], lp["fc2_w"], lp["fc2_b"], lp["gamma_2"]]

    in_specs = (
        [pl.BlockSpec((1, tq, C), lambda b, t: (b, t, 0)),      # query-row tile
         pl.BlockSpec((1, n_pad, C), lambda b, t: (b, 0, 0))]   # full tokens (K/V)
        + [_weight_spec(w.shape, single_buffer_weights) for w in pre]
        + [pl.BlockSpec((H, tq, n_pad), lambda b, t: (0, t, 0))]  # rel-bias tile
        + [_weight_spec(w.shape, single_buffer_weights) for w in post]
    )

    return pl.pallas_call(
        kernel,
        out_shape=jax.ShapeDtypeStruct((B, n_pad, C), jnp.float32),
        grid=(B, T),
        in_specs=in_specs,
        out_specs=pl.BlockSpec((1, tq, C), lambda b, t: (b, t, 0)),
        compiler_params=pltpu.CompilerParams(
            dimension_semantics=("parallel", "parallel"),
            vmem_limit_bytes=48 * 1024 * 1024),
    )(x, x, *pre, lp["rel_bias"], *post)


def beit_layer(x, lp, num_heads, tq, eps=1e-6):
    try:
        return _beit_layer_call(x, lp, num_heads, tq, eps, True)
    except Exception:
        # TODO(synk): pl.Buffered(1) (single-buffered resident weights) not
        #   accepted by this jax version -> fall back to default buffering.
        return _beit_layer_call(x, lp, num_heads, tq, eps, False)


# ----------------------------------------------------------------------------
# Token-padding policy (shared by parameter setup and the forward pass)
# ----------------------------------------------------------------------------
def _token_tiling(n):
    tq = 128 if n >= 128 else 8            # query tile (sublane multiple)
    n_pad = ((n + tq - 1) // tq) * tq      # pad token count to a tile multiple
    return tq, n_pad


# ----------------------------------------------------------------------------
# Parameter construction (deterministic, synthetic) + relative position index
# ----------------------------------------------------------------------------
def relative_position_index(Wh, Ww):
    num_rel = (2 * Wh - 1) * (2 * Ww - 1) + 3
    coords = np.stack(np.meshgrid(np.arange(Wh), np.arange(Ww), indexing="ij"))
    coords_flat = coords.reshape(2, -1)
    rel = coords_flat[:, :, None] - coords_flat[:, None, :]
    rel = rel.transpose(1, 2, 0).astype(np.int64)
    rel[:, :, 0] += Wh - 1
    rel[:, :, 1] += Ww - 1
    rel[:, :, 0] *= 2 * Ww - 1
    P = Wh * Ww
    idx = np.zeros((P + 1, P + 1), dtype=np.int64)
    idx[1:, 1:] = rel.sum(-1)
    idx[0, :] = num_rel - 3
    idx[:, 0] = num_rel - 2
    idx[0, 0] = num_rel - 1
    return idx, num_rel


def init_params(key, cfg):
    E = cfg["embed_dims"]
    H = cfg["num_heads"]
    Cin = cfg["in_channels"]
    p = cfg["patch_size"]
    mlp = cfg["mlp_ratio"] * E
    Wh, Ww = cfg["window_size"]
    N = Wh * Ww + 1
    _, n_pad = _token_tiling(N)
    idx, num_rel = relative_position_index(Wh, Ww)
    idx_flat = jnp.asarray(idx.reshape(-1))

    bf16 = jnp.bfloat16

    def nrm(k, shape, std=0.02):
        return std * jax.random.normal(k, shape, dtype=jnp.float32)

    keys = jax.random.split(key, 3 + cfg["num_layers"])
    params = {
        "patch_w": nrm(keys[0], (Cin * p * p, E)).astype(bf16),   # (in, out)
        "patch_b": nrm(keys[1], (1, E)),
        "cls_token": nrm(keys[2], (1, 1, E)),
        "layers": [],
    }
    for i in range(cfg["num_layers"]):
        lk = jax.random.split(keys[3 + i], 10)

        # relative position bias: gather -> (N, N, H) -> (H, N, N); pad to
        # (H, n_pad, n_pad) and fold the key-padding mask into the bias.
        rel_table = nrm(lk[0], (num_rel, H))
        rel = rel_table[idx_flat].reshape(N, N, H)
        rel = jnp.transpose(rel, (2, 0, 1))
        relp = jnp.zeros((H, n_pad, n_pad), jnp.float32)
        relp = relp.at[:, :N, :N].set(rel)
        relp = relp.at[:, :, N:].set(-1e9)            # mask padded key columns
        rel_bias = relp.astype(bf16)

        # fused QKV weights stored as (C,C) for Q and (C,2C) for K|V (in, out)
        qkv_w = nrm(lk[3], (E, 3 * E))
        wq = qkv_w[:, :E].astype(bf16)
        wkv = qkv_w[:, E:].astype(bf16)
        q_bias = nrm(lk[1], (1, E))
        v_bias = nrm(lk[2], (1, E))
        bkv = jnp.concatenate([jnp.zeros((1, E), jnp.float32), v_bias], axis=-1)

        lp = {
            "ln1_w": jnp.ones((1, E), jnp.float32),
            "ln1_b": jnp.zeros((1, E), jnp.float32),
            "wq": wq, "bq": q_bias,
            "wkv": wkv, "bkv": bkv,                   # k-bias is zero (qv_bias)
            "rel_bias": rel_bias,
            "proj_w": nrm(lk[4], (E, E)).astype(bf16),
            "proj_b": nrm(lk[5], (1, E)),
            "gamma_1": cfg["init_values"] * jnp.ones((1, E), jnp.float32),
            "ln2_w": jnp.ones((1, E), jnp.float32),
            "ln2_b": jnp.zeros((1, E), jnp.float32),
            "fc1_w": nrm(lk[6], (E, mlp)).astype(bf16),
            "fc1_b": nrm(lk[7], (1, mlp)),
            "fc2_w": nrm(lk[8], (mlp, E)).astype(bf16),
            "fc2_b": nrm(lk[9], (1, E)),
            "gamma_2": cfg["init_values"] * jnp.ones((1, E), jnp.float32),
        }
        params["layers"].append(lp)
    return params


# ----------------------------------------------------------------------------
# BEiT forward
# ----------------------------------------------------------------------------
def beit_forward(inputs, params, cfg):
    """inputs: (B, Cin, H, W) NCHW, matching the PyTorch reference."""
    B, Cin, Hh, Ww_ = inputs.shape
    p = cfg["patch_size"]
    E = cfg["embed_dims"]
    Hp, Wp = Hh // p, Ww_ // p
    N = Hp * Wp + 1
    tq, n_pad = _token_tiling(N)

    # patch extraction (glue): (B,Cin,Hp,p,Wp,p) -> (B*Hp*Wp, Cin*p*p); the
    # bf16 cast is part of this copy so no extra f32->bf16 pass materializes.
    xp = inputs.reshape(B, Cin, Hp, p, Wp, p)
    xp = xp.transpose(0, 2, 4, 1, 3, 5).reshape(B * Hp * Wp, Cin * p * p)
    xp = xp.astype(jnp.bfloat16)
    emb = patch_embed_matmul(xp, params["patch_w"], params["patch_b"])
    x = emb.reshape(B, Hp * Wp, E)

    # prepend cls token, then zero-pad the token axis to the tile multiple
    cls = jnp.broadcast_to(params["cls_token"], (B, 1, E))
    x = jnp.concatenate([cls, x], axis=1)                     # (B, N, E)
    x = jnp.pad(x, ((0, 0), (0, n_pad - N), (0, 0)))          # (B, n_pad, E)

    outs = []
    for i, lp in enumerate(params["layers"]):
        x = beit_layer(x, lp, cfg["num_heads"], tq=tq)
        # final_norm=False in this configuration (default) -> no final LN
        if i in cfg["out_indices"]:
            out = x[:, 1:N]
            out = out.reshape(B, Hp, Wp, E).transpose(0, 3, 1, 2)   # NCHW
            outs.append(out)
    return tuple(outs)


# ----------------------------------------------------------------------------
if __name__ == "__main__":
    cfg = dict(
        img_size=(32, 32),
        patch_size=8,
        in_channels=3,
        embed_dims=128,       # lane-dense channel dim (multiple of 128)
        num_layers=2,
        num_heads=4,
        mlp_ratio=4,
        out_indices=(0, 1),
        init_values=0.1,
    )
    cfg["window_size"] = (cfg["img_size"][0] // cfg["patch_size"],
                          cfg["img_size"][1] // cfg["patch_size"])

    key = jax.random.PRNGKey(0)
    kx, kp = jax.random.split(key)
    x = jax.random.normal(kx, (2, 3, 32, 32), dtype=jnp.float32)  # NCHW input
    params = init_params(kp, cfg)

    outs = beit_forward(x, params, cfg)
    outs = jax.block_until_ready(outs)

    Hp = cfg["img_size"][0] // cfg["patch_size"]
    Wp = cfg["img_size"][1] // cfg["patch_size"]
    assert len(outs) == len(cfg["out_indices"])
    for o in outs:
        assert o.shape == (2, cfg["embed_dims"], Hp, Wp)
        assert bool(jnp.all(jnp.isfinite(o)))
    print("KERNEL_OK")
</pallas_src>

<mosaic_0001>
module attributes {stable_mosaic.version = 11 : i64} {
  func.func @_patch_embed_kernel(%arg0: i32, %arg1: memref<32x192xbf16, #tpu.memory_space<vmem>>, %arg2: memref<192x128xbf16, #tpu.memory_space<vmem>>, %arg3: memref<1x128xf32, #tpu.memory_space<vmem>>, %arg4: memref<32x128xf32, #tpu.memory_space<vmem>>) attributes {dimension_semantics = [#tpu.dimension_semantics<parallel>], iteration_bounds = array<i64: 1>, scalar_prefetch = 0 : i64, scratch_operands = 0 : i64, tpu.core_type = #tpu.core_type<tc>, window_params = [{transform_indices = @transform_0, window_bounds = array<i64: 32, 192>}, {pipeline_mode = #tpu.pipeline_mode<synchronous>, transform_indices = @transform_1, window_bounds = array<i64: 192, 128>}, {pipeline_mode = #tpu.pipeline_mode<synchronous>, transform_indices = @transform_2, window_bounds = array<i64: 1, 128>}, {transform_indices = @transform_3, window_bounds = array<i64: 32, 128>}]} {
    %c0 = arith.constant 0 : index
    %c0_0 = arith.constant 0 : index
    %0 = vector.load %arg1[%c0, %c0_0] : memref<32x192xbf16, #tpu.memory_space<vmem>>, vector<32x192xbf16>
    %c0_1 = arith.constant 0 : index
    %c0_2 = arith.constant 0 : index
    %1 = vector.load %arg2[%c0_1, %c0_2] : memref<192x128xbf16, #tpu.memory_space<vmem>>, vector<192x128xbf16>
    %cst = arith.constant dense<0.000000e+00> : vector<32x128xf32>
    %2 = tpu.matmul %0, %1, %cst {dimension_numbers = #tpu.dot_dimension_numbers<[1], [0], [0], [1], [0, 0, 1, 1], [], []>} : vector<32x192xbf16>, vector<192x128xbf16>, vector<32x128xf32> -> vector<32x128xf32>
    %c0_3 = arith.constant 0 : index
    %c0_4 = arith.constant 0 : index
    %3 = vector.load %arg3[%c0_3, %c0_4] : memref<1x128xf32, #tpu.memory_space<vmem>>, vector<1x128xf32>
    %4 = vector.broadcast %3 : vector<1x128xf32> to vector<32x128xf32>
    %5 = arith.addf %2, %4 : vector<32x128xf32>
    %c0_5 = arith.constant 0 : index
    %c0_6 = arith.constant 0 : index
    %6 = vector.load %arg4[%c0_5, %c0_6] : memref<32x128xf32, #tpu.memory_space<vmem>>, vector<32x128xf32>
    tpu.vector_store %arg4[%c0_5, %c0_6], %5 {strides = array<i32>} : memref<32x128xf32, #tpu.memory_space<vmem>>, vector<32x128xf32>,
    return
  }
  func.func @transform_0(%arg0: i32) -> (i32, i32) {
    %c0_i32 = arith.constant 0 : i32
    %c0_i32_0 = arith.constant 0 : i32
    return %arg0, %c0_i32 : i32, i32
  }
  func.func @transform_1(%arg0: i32) -> (i32, i32) {
    %c0_i32 = arith.constant 0 : i32
    %c0_i32_0 = arith.constant 0 : i32
    %c0_i32_1 = arith.constant 0 : i32
    return %c0_i32, %c0_i32_0 : i32, i32
  }
  func.func @transform_2(%arg0: i32) -> (i32, i32) {
    %c0_i32 = arith.constant 0 : i32
    %c0_i32_0 = arith.constant 0 : i32
    %c0_i32_1 = arith.constant 0 : i32
    return %c0_i32, %c0_i32_0 : i32, i32
  }
  func.func @transform_3(%arg0: i32) -> (i32, i32) {
    %c0_i32 = arith.constant 0 : i32
    %c0_i32_0 = arith.constant 0 : i32
    return %arg0, %c0_i32 : i32, i32
  }
}

</mosaic_0001>

<llo_original>
// kernel: tpu_custom_call.1
$region0: #{tpu_custom_call.1}
  #allocation0 [shape = 'u32[]', space=smem, size = 0x4, offset = 0x4, fixed_abs, tag = 'smem constant byte address 0x4 - core index']
  #allocation1 [shape = 'u32[72,128]{1,0:T(1,128)}', space=vmem, size = 0x9000, scoped, tag = 'internal scratch']
  %s0 = inlined_call_operand.hbm [shape: bf16[32,192], index: 0, kind: input, shape index: {}]
  %s1 = inlined_call_operand.hbm [shape: bf16[192,128], index: 1, kind: input, shape index: {}]
  %s2 = inlined_call_operand.vmem [shape: f32[1,128], index: 2, kind: input, shape index: {}]
  %s3 = inlined_call_operand.hbm [shape: f32[32,128], index: 3, kind: output, shape index: {}]
  %s4 = sld [smem:[#allocation0]]
  $region30: #{tpu_custom_call.1} parent=0
    _
  %s6 = ssub.s32 1, %s4
  %s7 = scalar_select 0, %s6, %s4
  $region1: #{tpu_custom_call.1} parent=0
    #allocation2 [shape = 'u8[16384]{0}', space=vmem, size = 0x4000, scoped, tag = 'input window, operand 0, single buffered']
    #allocation3 [shape = 's32[1]{0}', space=sflag, size = 0x4, scoped, tag = 'scoped memory for tpu_custom_call.1']
    #allocation4 [shape = 's32[1]{0}', space=sflag, size = 0x4, scoped, tag = 'scoped memory for tpu_custom_call.1']
    #allocation5 [shape = 'u8[49152]{0}', space=vmem, size = 0xc000, scoped, tag = 'input window, operand 1, single buffered']
    #allocation6 [shape = 's32[1]{0}', space=sflag, size = 0x4, scoped, tag = 'scoped memory for tpu_custom_call.1']
    #allocation7 [shape = 'u8[16384]{0}', space=vmem, size = 0x4000, scoped, tag = 'output window, operand 0, single buffered']
    %8 = vsyncpa [#allocation3], 0
    %9 = vsyncpa [#allocation6], 0
    %10 = vsyncpa [#allocation4], 0
    // Predicated region
    $region2: #{tpu_custom_call.1} parent=1 // pred_check
      _
    $region3: #{tpu_custom_call.1} parent=1 // pred_check_branch
      %12 = sbr.rel (0) target = $region5
    $region4: #{tpu_custom_call.1} parent=1 // pred_region
      %14 = vsyncadd [#allocation3], 0
      %s15 = sshll.u32 %s0, 4
      %s16 = int_to_ptr.hbm [resolvable:$true] %s15
      %s17 = sshll.u32 [#allocation2], 4
      %s18 = int_to_ptr.vmem [resolvable:$true] %s17
      %23 = dma.hbm_to_vmem [thread:$0]  %s16, 512, %s18, [#allocation3], 128, 128, 8
    $region5: #{tpu_custom_call.1} parent=1 // pred_fallthru
      _
    // Predicated region
    $region6: #{tpu_custom_call.1} parent=1 // pred_check
      _
    $region7: #{tpu_custom_call.1} parent=1 // pred_check_branch
      %25 = sbr.rel (0) target = $region9
    $region8: #{tpu_custom_call.1} parent=1 // pred_region
      %27 = vsyncadd [#allocation6], 0
      %s28 = sshll.u32 %s1, 4
      %s29 = int_to_ptr.hbm [resolvable:$true] %s28
      %s30 = sshll.u32 [#allocation5], 4
      %s31 = int_to_ptr.vmem [resolvable:$true] %s30
      %36 = dma.hbm_to_vmem [thread:$0]  %s29, 1536, %s31, [#allocation6], 64, 64, 4
    $region9: #{tpu_custom_call.1} parent=1 // pred_fallthru
      _
    // Predicated region
    $region10: #{tpu_custom_call.1} parent=1 // pred_check
      _
    $region11: #{tpu_custom_call.1} parent=1 // pred_check_branch
      %38 = sbr.rel (0) target = $region13
    $region12: #{tpu_custom_call.1} parent=1 // pred_region
      _
    $region13: #{tpu_custom_call.1} parent=1 // pred_fallthru
      _
    // Predicated region
    $region14: #{tpu_custom_call.1} parent=1 // pred_check
      _
    $region15: #{tpu_custom_call.1} parent=1 // pred_check_branch
      %40 = sbr.rel (0) target = $region17
    $region16: #{tpu_custom_call.1} parent=1 // pred_region
      %42 = dma.done [#allocation3], 512
    $region17: #{tpu_custom_call.1} parent=1 // pred_fallthru
      _
    // Predicated region
    $region18: #{tpu_custom_call.1} parent=1 // pred_check
      _
    $region19: #{tpu_custom_call.1} parent=1 // pred_check_branch
      %44 = sbr.rel (0) target = $region21
    $region20: #{tpu_custom_call.1} parent=1 // pred_region
      %46 = dma.done [#allocation6], 1536
    $region21: #{tpu_custom_call.1} parent=1 // pred_fallthru
      _
    %v48 = vld [vmem:[#allocation2] sm:$0xff]
    %v49 = vld [vmem:[#allocation2 + $0x8] sm:$0xff]
    %v50 = vld [vmem:[#allocation2 + $0x10] sm:$0xff]
    %v51 = vld [vmem:[#allocation2 + $0x18] sm:$0xff]
    %v52 = vld [vmem:[#allocation5] sm:$0xf]
    %v53 = vld [vmem:[#allocation5 + $0x4] sm:$0xf]
    %v54 = vld [vmem:[#allocation5 + $0x8] sm:$0xf]
    %v55 = vld [vmem:[#allocation5 + $0xc] sm:$0xf]
    %v56 = vld [vmem:[#allocation5 + $0x10] sm:$0xf]
    %v57 = vld [vmem:[#allocation5 + $0x14] sm:$0xf]
    %v58 = vld [vmem:[#allocation5 + $0x18] sm:$0xf]
    %v59 = vld [vmem:[#allocation5 + $0x1c] sm:$0xf]
    %v60 = vld [vmem:[#allocation5 + $0x20] sm:$0xf]
    %v61 = vld [vmem:[#allocation5 + $0x24] sm:$0xf]
    %v62 = vld [vmem:[#allocation5 + $0x28] sm:$0xf]
    %v63 = vld [vmem:[#allocation5 + $0x2c] sm:$0xf]
    %v64 = vld [vmem:[#allocation5 + $0x30] sm:$0xf]
    %v65 = vld [vmem:[#allocation5 + $0x34] sm:$0xf]
    %v66 = vld [vmem:[#allocation5 + $0x38] sm:$0xf]
    %v67 = vld [vmem:[#allocation5 + $0x3c] sm:$0xf]
    %v68 = vld [vmem:[#allocation5 + $0x40] sm:$0xf]
    %v69 = vld [vmem:[#allocation5 + $0x44] sm:$0xf]
    %v70 = vld [vmem:[#allocation5 + $0x48] sm:$0xf]
    %v71 = vld [vmem:[#allocation5 + $0x4c] sm:$0xf]
    %v72 = vld [vmem:[#allocation5 + $0x50] sm:$0xf]
    %v73 = vld [vmem:[#allocation5 + $0x54] sm:$0xf]
    %v74 = vld [vmem:[#allocation5 + $0x58] sm:$0xf]
    %v75 = vld [vmem:[#allocation5 + $0x5c] sm:$0xf]
    %v76 = vld [vmem:[%s2] sm:$0x1]
    %v78 = vperm.slane %v76, 0
    %v84 = vunpack.c.l.b16 %v48
    %v85 = vunpack.c.h.b16 %v48
    %v86 = vunpack.c.l.b16 %v49
    %v87 = vunpack.c.h.b16 %v49
    %v88 = vunpack.c.l.b16 %v50
    %v89 = vunpack.c.h.b16 %v50
    %v90 = vunpack.c.l.b16 %v51
    %v91 = vunpack.c.h.b16 %v51
    %v92 = vpack.c.b16 %v86, %v84
    %v93 = vpack.c.b16 %v87, %v85
    %v94 = vpack.c.b16 %v90, %v88
    %v95 = vpack.c.b16 %v91, %v89
    %v122 = vunpack.c.l.b16 %v52
    %v123 = vunpack.c.l.b16 %v53
    %v124 = vunpack.c.l.b16 %v54
    %v125 = vunpack.c.l.b16 %v55
    %v126 = vunpack.c.l.b16 %v56
    %v127 = vunpack.c.l.b16 %v57
    %v128 = vunpack.c.l.b16 %v58
    %v129 = vunpack.c.l.b16 %v59
    %v130 = vunpack.c.l.b16 %v60
    %v131 = vunpack.c.l.b16 %v61
    %v132 = vunpack.c.l.b16 %v62
    %v133 = vunpack.c.l.b16 %v63
    %v134 = vunpack.c.l.b16 %v64
    %v135 = vunpack.c.l.b16 %v65
    %v136 = vunpack.c.l.b16 %v66
    %v137 = vunpack.c.l.b16 %v67
    %v138 = vunpack.c.l.b16 %v68
    %v139 = vunpack.c.l.b16 %v69
    %v140 = vunpack.c.l.b16 %v70
    %v141 = vunpack.c.l.b16 %v71
    %v142 = vunpack.c.l.b16 %v72
    %v143 = vunpack.c.l.b16 %v73
    %v144 = vunpack.c.l.b16 %v74
    %v145 = vunpack.c.l.b16 %v75
    %v146 = vpack.c.b16 %v123, %v122
    %v147 = vpack.c.b16 %v125, %v124
    %v148 = vpack.c.b16 %v127, %v126
    %v149 = vpack.c.b16 %v129, %v128
    %v150 = vpack.c.b16 %v131, %v130
    %v151 = vpack.c.b16 %v133, %v132
    %v152 = vpack.c.b16 %v135, %v134
    %v153 = vpack.c.b16 %v137, %v136
    %v154 = vpack.c.b16 %v139, %v138
    %v155 = vpack.c.b16 %v141, %v140
    %v156 = vpack.c.b16 %v143, %v142
    %v157 = vpack.c.b16 %v145, %v144
    %vm170 = vcmask 523264
    %v172 = vsel %vm170, %v93, 0
    %v175 = vsel %vm170, %v95, 0
    %177 = vmatpush.bf16.msra.mxu0 %v153
    %178 = vmatpush.bf16.msra.mxu0 %v152
    %179 = vmatpush.bf16.msra.mxu0 %v151
    %180 = vmatpush.bf16.msra.mxu0 %v150
    %181 = vmatpush.bf16.msra.mxu0 %v149
    %182 = vmatpush.bf16.msra.mxu0 %v148
    %183 = vmatpush.bf16.msra.mxu0 %v147
    %184 = vmatpush.bf16.msra.mxu0 %v146
    %185 = vmatmul.bf16.gmra.mxu0 %v92
    %v186 = vpop.f32.mrf.mxu0
    %v187 = vadd.f32 %v78, %v186
    %v188 = vpop.f32.mrf.mxu0
    %v189 = vadd.f32 %v78, %v188
    %190 = vmatmul.bf16.gmra.mxu0 %v94
    %v191 = vpop.f32.mrf.mxu0
    %v192 = vadd.f32 %v78, %v191
    %v193 = vpop.f32.mrf.mxu0
    %v194 = vadd.f32 %v78, %v193
    %195 = vdwg.mxu0
    %196 = vmatpush.bf16.msra.mxu0 0
    %197 = vmatpush.bf16.msra.mxu0 0
    %198 = vmatpush.bf16.msra.mxu0 0
    %199 = vmatpush.bf16.msra.mxu0 0
    %200 = vmatpush.bf16.msra.mxu0 %v157
    %201 = vmatpush.bf16.msra.mxu0 %v156
    %202 = vmatpush.bf16.msra.mxu0 %v155
    %203 = vmatpush.bf16.msra.mxu0 %v154
    %204 = vmatmul.bf16.gmra.mxu0 %v172
    %v205 = vpop.f32.mrf.mxu0
    %v206 = vadd.f32 %v187, %v205
    %v207 = vpop.f32.mrf.mxu0
    %v208 = vadd.f32 %v189, %v207
    %209 = vmatmul.bf16.gmra.mxu0 %v175
    %v210 = vpop.f32.mrf.mxu0
    %v211 = vadd.f32 %v192, %v210
    %v212 = vpop.f32.mrf.mxu0
    %v213 = vadd.f32 %v194, %v212
    %214 = vdwg.mxu0
    %215 = vst [vmem:[#allocation7] sm:$0xff] %v206
    %216 = vst [vmem:[#allocation7 + $0x8] sm:$0xff] %v208
    %217 = vst [vmem:[#allocation7 + $0x10] sm:$0xff] %v211
    %218 = vst [vmem:[#allocation7 + $0x18] sm:$0xff] %v213
    // Predicated region
    $region22: #{tpu_custom_call.1} parent=1 // pred_check
      _
    $region23: #{tpu_custom_call.1} parent=1 // pred_check_branch
      %220 = sbr.rel (0) target = $region25
    $region24: #{tpu_custom_call.1} parent=1 // pred_region
      %222 = vsyncadd [#allocation4], 0
      %s223 = sshll.u32 [#allocation7], 4
      %s224 = int_to_ptr.vmem [resolvable:$true] %s223
      %s225 = sshll.u32 %s3, 4
      %s226 = int_to_ptr.hbm [resolvable:$true] %s225
      %231 = dma.vmem_to_hbm [thread:$0]  %s224, 512, %s226, [#allocation4], 128, 128, 8
    $region25: #{tpu_custom_call.1} parent=1 // pred_fallthru
      _
    // Predicated region
    $region26: #{tpu_custom_call.1} parent=1 // pred_check
      _
    $region27: #{tpu_custom_call.1} parent=1 // pred_check_branch
      %233 = sbr.rel (0) target = $region29
    $region28: #{tpu_custom_call.1} parent=1 // pred_region
      %235 = dma.done [#allocation4], 512
    $region29: #{tpu_custom_call.1} parent=1 // pred_fallthru
      _
    %236 = vsyncpa [#allocation3], 1
    %237 = vsyncpa [#allocation6], 1
    %238 = vsyncpa [#allocation4], 1

</llo_original>
